<compile_context>
chip_gen: v5e
topology: v5e:2x2
jax: 0.10.0
libtpu: 0.0.40
codegen_flags: <defaults>
</compile_context>

<pallas_src>
import jax
import jax.numpy as jnp
import numpy as np
from jax.experimental import pallas as pl
from jax.experimental.pallas import tpu as pltpu

# ----- model hyper-parameters (small, consistent with Generator.__init__) ----
HIDDEN = 32                      # hidden_features
NOISE_FEATURES = 8               # noise_features
OUT_FEATURES = 3                 # out_features
NUM_LAYERS = 4                   # num_hidden_layers
K = NOISE_FEATURES // NUM_LAYERS # noise features per layer
NOISE_RES = 16                   # Noise image resolution
NEG_SLOPE = 0.01                 # nn.LeakyReLU default slope

# Augmented-contraction layout (performance review items 1-3):
#   aug rows = [ h (32) | nv (8) | ones (1) | zero pad (7) ]  -> 48 rows.
STAT = 16                        # static rows appended to every layer matmul
AUG = HIDDEN + STAT              # 48, sublane-aligned (6 groups of 8)
ONES_COL = HIDDEN + NOISE_FEATURES   # column index of the folded-bias (ones) row


def _round_up(x, m):
    return ((x + m - 1) // m) * m


def _leaky_relu(x):
    # max(x, a*x) == leaky_relu(x) for 0 < a < 1; 2 VALU ops instead of 3.
    return jnp.maximum(x, NEG_SLOPE * x)


# -----------------------------------------------------------------------------
# Pallas kernel 1: NoiseTransforms.forward  (the spec module)
#   out[b, 2*Mi + m, p] = sum_n coords[b, p, n] * T[Mi, m, n]
# done as two VPU rank-1 updates (a K=2 contraction is wasted on the MXU).
# -----------------------------------------------------------------------------
def noise_transform_kernel(coords_ref,   # [1, 2, TILE_N]   (x row, y row)
                           tflat_ref,    # [2M, 2]          transforms flattened
                           out_ref):     # [1, 2M, TILE_N]
    cx = coords_ref[0, 0:1, :]           # [1, N]
    cy = coords_ref[0, 1:2, :]           # [1, N]
    t = tflat_ref[...]                   # [2M, 2]
    out_ref[0] = t[:, 0:1] * cx + t[:, 1:2] * cy


def noise_transforms_forward(transforms, coords_t, tile_n):
    """transforms [M,2,2], coords_t [B,2,N_pad] -> [B, M, 2, N_pad]."""
    B, _, n_pad = coords_t.shape
    M = transforms.shape[0]
    tflat = transforms.reshape(M * 2, 2).astype(jnp.float32)
    num_tiles = n_pad // tile_n
    out = pl.pallas_call(
        noise_transform_kernel,
        out_shape=jax.ShapeDtypeStruct((B, M * 2, n_pad), jnp.float32),
        grid_spec=pltpu.PrefetchScalarGridSpec(
            num_scalar_prefetch=0,
            grid=(B, num_tiles),
            in_specs=[
                pl.BlockSpec((1, 2, tile_n), lambda b, n: (b, 0, n)),
                pl.BlockSpec((M * 2, 2), lambda b, n: (0, 0)),
            ],
            out_specs=pl.BlockSpec((1, M * 2, tile_n), lambda b, n: (b, 0, n)),
        ),
        compiler_params=pltpu.CompilerParams(
            dimension_semantics=("parallel", "parallel")),
    )(coords_t, tflat)
    return out.reshape(B, M, 2, n_pad)


# -----------------------------------------------------------------------------
# Pallas kernel 2: per-point generator MLP stack (matmul hot path).
# All activations are [rows, N_tile] (features on sublanes, points on lanes).
# Bias / noise / conditioning are folded into the augmented MXU contraction.
# -----------------------------------------------------------------------------
def generator_kernel(nv_ref,     # [1, 8, TILE_N]     sampled noise values
                     w0_ref,     # [H, STAT]          layer-0 folded weight
                     waug_ref,   # [1, L, H, AUG]     per-batch folded weights
                     wout_ref,   # [O, AUG]           output projection (+bias)
                     out_ref):   # [1, O, TILE_N]
    nv = nv_ref[0]                                   # [8, N] f32
    n = nv.shape[1]
    dt = w0_ref.dtype

    # Static augmented rows, built once per grid step: [nv(8); ones(1); 0(7)].
    stat = jnp.concatenate(
        [nv,
         jnp.ones((1, n), jnp.float32),
         jnp.zeros((STAT - NOISE_FEATURES - 1, n), jnp.float32)], axis=0)
    stat_c = stat.astype(dt)                         # [STAT, N]

    # Layer 0: the lane-constant part (wlin[0]@x0 + blin[0]) and the two noise
    # columns live in one narrow [H,16] MXU matmul — no [H,H] matmul, no VPU
    # rank-1 updates, no broadcast of the learned constant.
    h = jnp.dot(w0_ref[...], stat_c, preferred_element_type=jnp.float32)
    h = _leaky_relu(h)

    # Layers 1..3 and tail-linear-1: each is ONE [H, AUG] @ [AUG, N] matmul.
    # The previous layer's conditioning affine W@(s*h+b) = (W*s)@h + W@b, the
    # bias, and this layer's K=2 noise columns are folded into waug.
    for l in range(NUM_LAYERS):
        aug = jnp.concatenate([h.astype(dt), stat_c], axis=0)   # [AUG, N]
        h = jnp.dot(waug_ref[0, l], aug, preferred_element_type=jnp.float32)
        h = _leaky_relu(h)

    # Output projection; its bias rides the ones column of the static block.
    aug = jnp.concatenate([h.astype(dt), stat_c], axis=0)
    out_ref[0] = jnp.dot(wout_ref[...], aug, preferred_element_type=jnp.float32)


# -----------------------------------------------------------------------------
# Plain-JAX glue (matches the PyTorch reference semantics exactly).
# -----------------------------------------------------------------------------
def sample_bilinear(image, coords):
    """image [M, Hres, Wres], coords [..., M, 2] -> values [..., M]. (reference)"""
    _, height, width = image.shape
    x = coords[..., 0] - 0.5
    y = coords[..., 1] - 0.5
    x0 = jnp.floor(x).astype(jnp.int32)
    x1 = x0 + 1
    y0 = jnp.floor(y).astype(jnp.int32)
    y1 = y0 + 1
    xw = x - x0.astype(x.dtype)
    yw = y - y0.astype(y.dtype)
    x0 = x0 % width
    x1 = x1 % width
    y0 = y0 % height
    y1 = y1 % height
    fid = jnp.arange(image.shape[0])
    fid = fid.reshape((1,) * (coords.ndim - 2) + (-1,))
    i00 = image[fid, y0, x0]
    i01 = image[fid, y0, x1]
    i10 = image[fid, y1, x0]
    i11 = image[fid, y1, x1]
    i0 = i00 + xw * (i01 - i00)   # torch.lerp
    i1 = i10 + xw * (i11 - i10)
    return i0 + yw * (i1 - i0)


def sample_bilinear_t(image, x, y):
    """Transposed-layout bilinear: image [M,H,W], x/y [B,M,N] -> [B,M,N]."""
    _, height, width = image.shape
    x = x - 0.5
    y = y - 0.5
    x0 = jnp.floor(x).astype(jnp.int32)
    x1 = x0 + 1
    y0 = jnp.floor(y).astype(jnp.int32)
    y1 = y0 + 1
    xw = x - x0.astype(x.dtype)
    yw = y - y0.astype(y.dtype)
    x0 = x0 % width
    x1 = x1 % width
    y0 = y0 % height
    y1 = y1 % height
    fid = jnp.arange(image.shape[0]).reshape(1, -1, 1)
    i00 = image[fid, y0, x0]
    i01 = image[fid, y0, x1]
    i10 = image[fid, y1, x0]
    i11 = image[fid, y1, x1]
    i0 = i00 + xw * (i01 - i00)
    i1 = i10 + xw * (i11 - i10)
    return i0 + yw * (i1 - i0)


def _linear_init(key, fan_in, fan_out):
    kw, kb = jax.random.split(key)
    bound = 1.0 / np.sqrt(fan_in)
    w = jax.random.uniform(kw, (fan_in, fan_out), jnp.float32, -bound, bound)
    b = jax.random.uniform(kb, (fan_out,), jnp.float32, -bound, bound)
    return w, b


def init_params(key):
    ks = jax.random.split(key, 32)
    params = {}
    params["input"] = jnp.ones((1, HIDDEN), jnp.float32)

    # NoiseTransforms: rotation @ shear, scaled by 2**(i-4)
    angles = 2.0 * jnp.pi * jax.random.uniform(ks[0], (NOISE_FEATURES,))
    c, s = jnp.cos(angles), jnp.sin(angles)
    rot = jnp.stack([jnp.stack([c, s], -1), jnp.stack([-s, c], -1)], -2)   # [M,2,2]
    sh = jax.random.normal(ks[1], (NOISE_FEATURES,))
    shear = jnp.stack(
        [jnp.stack([jnp.ones_like(sh), jnp.zeros_like(sh)], -1),
         jnp.stack([sh, jnp.ones_like(sh)], -1)], -2)                      # [M,2,2]
    transforms = jnp.matmul(rot, shear)
    scale_pow = 2.0 ** (jnp.arange(NOISE_FEATURES, dtype=jnp.float32) - 4.0)
    params["transforms"] = transforms * scale_pow[:, None, None]

    # condition head: 9 -> 64 -> 64 -> 64 (ReLU after each)
    params["cond_head"] = [_linear_init(ks[2], 9, 64),
                           _linear_init(ks[3], 64, 64),
                           _linear_init(ks[4], 64, 64)]

    # layer condition maps: 64 -> 2H -(ReLU)-> 2H
    params["layer_maps"] = []
    for i in range(NUM_LAYERS):
        wa, ba = _linear_init(ks[5 + i], 64, 2 * HIDDEN)
        wb, bb = _linear_init(ks[9 + i], 2 * HIDDEN, 2 * HIDDEN)
        params["layer_maps"].append((wa, ba, wb, bb))

    # noise layers (GeneratorLayer)
    wlins, blins, wnoises = [], [], []
    idx = 13
    for i in range(NUM_LAYERS):
        w, b = _linear_init(ks[idx], HIDDEN, HIDDEN); idx += 1
        bound = 1.0 / np.sqrt(K)
        wn = jax.random.uniform(ks[idx], (K, HIDDEN), jnp.float32, -bound, bound); idx += 1
        wlins.append(w); blins.append(b); wnoises.append(wn)
    params["wlin"] = jnp.stack(wlins)      # [L, H, H]  (in, out)
    params["blin"] = jnp.stack(blins)      # [L, H]
    params["wnoise"] = jnp.stack(wnoises)  # [L, K, H]

    # tail: H -> H -(LeakyReLU)-> O
    wt1, bt1 = _linear_init(ks[idx], HIDDEN, HIDDEN); idx += 1
    wt2, bt2 = _linear_init(ks[idx], HIDDEN, OUT_FEATURES); idx += 1
    params["wt1"], params["bt1"] = wt1, bt1[None, :]
    params["wt2"], params["bt2"] = wt2, bt2[None, :]

    # Noise module image
    params["noise_image"] = jax.random.normal(
        ks[idx], (NOISE_FEATURES, NOISE_RES, NOISE_RES), jnp.float32)
    return params


def _condition_maps(params, conditions):
    z = conditions.astype(jnp.float32)
    for w, b in params["cond_head"]:
        z = jax.nn.relu(z @ w + b)
    scales, biases = [], []
    for (wa, ba, wb, bb) in params["layer_maps"]:
        m = jax.nn.relu(z @ wa + ba) @ wb + bb
        scales.append(m[:, :HIDDEN])
        biases.append(m[:, HIDDEN:])
    return jnp.stack(scales, axis=1), jnp.stack(biases, axis=1)   # [B, L, H] each


def _fold_generator_weights(params, scale, bias, matmul_dtype):
    """Fold biases, K=2 noise columns and the per-layer conditioning affine into
    augmented MXU weights (performance-review items 1-3)."""
    B = scale.shape[0]
    wlinT = jnp.transpose(params["wlin"], (0, 2, 1))      # [L, H, H] (out, in)
    wnoiseT = jnp.transpose(params["wnoise"], (0, 2, 1))  # [L, H, K]
    blin = params["blin"]                                  # [L, H]
    wt1T = params["wt1"].T                                 # [H, H]
    wt2T = params["wt2"].T                                 # [O, H]
    bt1 = params["bt1"][0]                                 # [H]
    bt2 = params["bt2"][0]                                 # [O]
    x0 = params["input"][0]                                # [H]

    # Layer 0: the lane-constant part of the first matmul is a fixed [H] vector.
    c0 = wlinT[0] @ x0 + blin[0]
    w0 = jnp.zeros((HIDDEN, STAT), jnp.float32)
    w0 = w0.at[:, 0:K].set(wnoiseT[0])                     # noise cols (nv rows 0,1)
    w0 = w0.at[:, NOISE_FEATURES].set(c0)                  # ones column

    # Layers 1..3 and tail-linear-1 (per batch, since the conditioning affine of
    # the previous layer is folded in):  W @ (s*h + b) = (W*diag(s)) @ h + W@b.
    waug = jnp.zeros((B, NUM_LAYERS, HIDDEN, AUG), jnp.float32)
    for l in range(1, NUM_LAYERS):
        w = wlinT[l]
        waug = waug.at[:, l - 1, :, :HIDDEN].set(
            w[None] * scale[:, l - 1][:, None, :])
        waug = waug.at[:, l - 1, :, HIDDEN + K * l: HIDDEN + K * l + K].set(
            jnp.broadcast_to(wnoiseT[l], (B, HIDDEN, K)))
        waug = waug.at[:, l - 1, :, ONES_COL].set(
            blin[l][None, :] + jnp.einsum("oh,bh->bo", w, bias[:, l - 1]))
    waug = waug.at[:, NUM_LAYERS - 1, :, :HIDDEN].set(
        wt1T[None] * scale[:, NUM_LAYERS - 1][:, None, :])
    waug = waug.at[:, NUM_LAYERS - 1, :, ONES_COL].set(
        bt1[None, :] + jnp.einsum("oh,bh->bo", wt1T, bias[:, NUM_LAYERS - 1]))

    # Output projection, with its bias folded into the ones column.
    wout = jnp.zeros((OUT_FEATURES, AUG), jnp.float32)
    wout = wout.at[:, :HIDDEN].set(wt2T)
    wout = wout.at[:, ONES_COL].set(bt2)

    return (w0.astype(matmul_dtype), waug.astype(matmul_dtype),
            wout.astype(matmul_dtype))


def generator_forward(params, conditions, coords, *, tile_n=8192,
                      matmul_dtype=jnp.float32,
                      use_pallas_noise_transform=True):
    """conditions [B, 9], coords [B, ..., 2] -> [B, ..., OUT_FEATURES].

    tile_n: points per grid step (lane axis).  Per-step VMEM footprint is
        ~4-6 MiB at 8192, well inside the v7x 32 MiB scoped / 64 MiB physical
        budget; v5e/v6e (128 MiB VMEM) can go 16384.  Keep B * num_tiles >= 2
        so v7x's two TensorCores both get work.
    matmul_dtype: f32 (default, accurate) or bf16.  bf16 is MXU-native on ALL
        generations (v5e included — only its VPU/EUP lack bf16); accumulation
        stays f32 either way.
    use_pallas_noise_transform: run NoiseTransforms.forward as its Pallas
        kernel (the spec module).  Set False to leave that einsum in plain JAX
        so XLA fuses it with the bilinear-gather index math and skips the
        [B,16,N] HBM round trip.
    """
    B = coords.shape[0]
    pts_shape = coords.shape[1:-1]
    coords_flat = coords.reshape(B, -1, 2).astype(jnp.float32)
    N = coords_flat.shape[1]

    # Points-on-lanes: pad N to a multiple of the lane tile, transpose coords.
    tile_n = min(tile_n, _round_up(N, 128))
    n_pad = _round_up(N, tile_n)
    num_tiles = n_pad // tile_n
    coords_t = jnp.transpose(coords_flat, (0, 2, 1))                 # [B, 2, N]
    coords_t = jnp.pad(coords_t, ((0, 0), (0, 0), (0, n_pad - N)))   # [B, 2, N_pad]

    # NoiseTransforms.forward, lane-dense output [B, M, 2, N_pad].
    if use_pallas_noise_transform:
        nc = noise_transforms_forward(params["transforms"], coords_t, tile_n)
    else:
        nc = jnp.einsum("Mmc,bcp->bMmp", params["transforms"], coords_t)

    # TODO(synk): the data-dependent bilinear gather from the noise image stays
    # in plain JAX (no safe vector-gather lowering inside a TPU Pallas kernel).
    nv_t = sample_bilinear_t(params["noise_image"],
                             nc[:, :, 0, :], nc[:, :, 1, :])          # [B, M, N_pad]

    # Fold conditioning / biases / noise columns into augmented MXU weights.
    scale, bias = _condition_maps(params, conditions)                 # [B, L, H]
    w0, waug, wout = _fold_generator_weights(params, scale, bias, matmul_dtype)

    itemsize = jnp.dtype(matmul_dtype).itemsize
    flops = 2 * B * n_pad * (HIDDEN * STAT + NUM_LAYERS * HIDDEN * AUG
                             + OUT_FEATURES * AUG)
    bytes_accessed = int(nv_t.size * 4 + B * n_pad * OUT_FEATURES * 4
                         + (w0.size + waug.size + wout.size) * itemsize)

    # NOTE: if the nv input DMA ever becomes exposed (very short steps), add
    # pipeline_mode=pl.Buffered(3) to its BlockSpec; not needed at these sizes.
    out_t = pl.pallas_call(
        generator_kernel,
        out_shape=jax.ShapeDtypeStruct((B, OUT_FEATURES, n_pad), jnp.float32),
        grid_spec=pltpu.PrefetchScalarGridSpec(
            num_scalar_prefetch=0,
            grid=(B, num_tiles),
            in_specs=[
                pl.BlockSpec((1, NOISE_FEATURES, tile_n), lambda b, n: (b, 0, n)),
                pl.BlockSpec((HIDDEN, STAT), lambda b, n: (0, 0)),
                pl.BlockSpec((1, NUM_LAYERS, HIDDEN, AUG), lambda b, n: (b, 0, 0, 0)),
                pl.BlockSpec((OUT_FEATURES, AUG), lambda b, n: (0, 0)),
            ],
            out_specs=pl.BlockSpec((1, OUT_FEATURES, tile_n), lambda b, n: (b, 0, n)),
        ),
        compiler_params=pltpu.CompilerParams(
            dimension_semantics=("parallel", "parallel"),
            vmem_limit_bytes=32 * 1024 * 1024),
        cost_estimate=pl.CostEstimate(flops=flops, transcendentals=0,
                                      bytes_accessed=bytes_accessed),
    )(nv_t, w0, waug, wout)

    out = jnp.transpose(out_t[:, :, :N], (0, 2, 1))       # [B, N, O]
    return out.reshape((B,) + pts_shape + (OUT_FEATURES,))


def generator_reference(params, conditions, coords):
    """Pure-JAX reference mirroring the PyTorch forward."""
    B = coords.shape[0]
    coords_flat = coords.reshape(B, -1, 2).astype(jnp.float32)
    N = coords_flat.shape[1]
    noise_coords = jnp.einsum("bpc,Mmc->bpMm", coords_flat, params["transforms"])
    noise_values = sample_bilinear(params["noise_image"], noise_coords)
    scale, bias = _condition_maps(params, conditions)
    x = jnp.broadcast_to(params["input"][0], (B, N, HIDDEN))
    for i in range(NUM_LAYERS):
        nl = noise_values[..., i * K:(i + 1) * K]
        h = x @ params["wlin"][i] + params["blin"][i] + nl @ params["wnoise"][i]
        h = _leaky_relu(h)
        x = scale[:, i][:, None, :] * h + bias[:, i][:, None, :]
    t = _leaky_relu(x @ params["wt1"] + params["bt1"][0])
    out = t @ params["wt2"] + params["bt2"][0]
    return out.reshape(coords.shape[:-1] + (OUT_FEATURES,))


if __name__ == "__main__":
    key = jax.random.PRNGKey(0)
    pkey, ckey, xkey = jax.random.split(key, 3)
    params = init_params(pkey)

    B, N = 2, 64
    conditions = jax.random.normal(ckey, (B, 9), jnp.float32)
    coords = jax.random.uniform(xkey, (B, N, 2), jnp.float32, 0.0, float(NOISE_RES))

    # --- NoiseTransforms.forward (the spec module) via its Pallas kernel -----
    n_pad = _round_up(N, 128)
    coords_t = jnp.pad(jnp.transpose(coords, (0, 2, 1)),
                       ((0, 0), (0, 0), (0, n_pad - N)))
    nt = noise_transforms_forward(params["transforms"], coords_t, 128)
    nt = jax.block_until_ready(nt)                                # [B, M, 2, n_pad]
    nt_ref = jnp.einsum("bnc,Mmc->bMmn", coords, params["transforms"])
    np.testing.assert_allclose(np.asarray(nt[..., :N]), np.asarray(nt_ref),
                               rtol=1e-5, atol=1e-5)

    # --- full generator forward, f32 matmuls --------------------------------
    ref = generator_reference(params, conditions, coords)
    out = generator_forward(params, conditions, coords, matmul_dtype=jnp.float32)
    out = jax.block_until_ready(out)
    assert out.shape == (B, N, OUT_FEATURES)
    assert bool(jnp.all(jnp.isfinite(out)))
    np.testing.assert_allclose(np.asarray(out), np.asarray(ref), rtol=5e-3, atol=5e-3)

    # --- plain-JAX noise-transform path (XLA fuses einsum into the gather) ---
    out_fused = generator_forward(params, conditions, coords,
                                  matmul_dtype=jnp.float32,
                                  use_pallas_noise_transform=False)
    out_fused = jax.block_until_ready(out_fused)
    np.testing.assert_allclose(np.asarray(out_fused), np.asarray(ref),
                               rtol=5e-3, atol=5e-3)

    # --- multi-tile / padded-N path (exercises the N grid axis) --------------
    coords2 = jax.random.uniform(jax.random.PRNGKey(7), (B, 13, 23, 2),
                                 jnp.float32, 0.0, float(NOISE_RES))
    out2 = generator_forward(params, conditions, coords2, tile_n=128,
                             matmul_dtype=jnp.float32)
    out2 = jax.block_until_ready(out2)
    ref2 = generator_reference(params, conditions, coords2)
    np.testing.assert_allclose(np.asarray(out2), np.asarray(ref2),
                               rtol=5e-3, atol=5e-3)

    # --- bf16 matmul path (MXU-native on v5e/v6e/v7x), f32 accumulation ------
    out_bf16 = generator_forward(params, conditions, coords,
                                 matmul_dtype=jnp.bfloat16)
    out_bf16 = jax.block_until_ready(out_bf16)
    assert bool(jnp.all(jnp.isfinite(out_bf16)))
    np.testing.assert_allclose(np.asarray(out_bf16), np.asarray(ref),
                               rtol=6e-2, atol=6e-2)

    print("KERNEL_OK")
</pallas_src>

<mosaic_0001>
module attributes {stable_mosaic.version = 11 : i64} {
  func.func @noise_transform_kernel(%arg0: i32, %arg1: i32, %arg2: memref<1x2x128xf32, #tpu.memory_space<vmem>>, %arg3: memref<16x2xf32, #tpu.memory_space<vmem>>, %arg4: memref<1x16x128xf32, #tpu.memory_space<vmem>>) attributes {dimension_semantics = [#tpu.dimension_semantics<parallel>, #tpu.dimension_semantics<parallel>], iteration_bounds = array<i64: 2, 1>, scalar_prefetch = 0 : i64, scratch_operands = 0 : i64, tpu.core_type = #tpu.core_type<tc>, window_params = [{transform_indices = @transform_0, window_bounds = array<i64: 1, 2, 128>}, {pipeline_mode = #tpu.pipeline_mode<synchronous>, transform_indices = @transform_1, window_bounds = array<i64: 16, 2>}, {transform_indices = @transform_2, window_bounds = array<i64: 1, 16, 128>}]} {
    %c0 = arith.constant 0 : index
    %c0_0 = arith.constant 0 : index
    %c0_1 = arith.constant 0 : index
    %0 = vector.load %arg2[%c0, %c0_0, %c0_1] : memref<1x2x128xf32, #tpu.memory_space<vmem>>, vector<1x1x128xf32>
    %1 = vector.shape_cast %0 : vector<1x1x128xf32> to vector<1x128xf32>
    %c0_2 = arith.constant 0 : index
    %c1 = arith.constant 1 : index
    %c0_3 = arith.constant 0 : index
    %2 = vector.load %arg2[%c0_2, %c1, %c0_3] : memref<1x2x128xf32, #tpu.memory_space<vmem>>, vector<1x1x128xf32>
    %3 = vector.shape_cast %2 : vector<1x1x128xf32> to vector<1x128xf32>
    %c0_4 = arith.constant 0 : index
    %c0_5 = arith.constant 0 : index
    %4 = vector.load %arg3[%c0_4, %c0_5] : memref<16x2xf32, #tpu.memory_space<vmem>>, vector<16x2xf32>
    %5 = vector.extract_strided_slice %4 {offsets = [0, 0], sizes = [16, 1], strides = [1, 1]} : vector<16x2xf32> to vector<16x1xf32>
    %6 = vector.broadcast %5 : vector<16x1xf32> to vector<16x128xf32>
    %7 = vector.broadcast %1 : vector<1x128xf32> to vector<16x128xf32>
    %8 = arith.mulf %6, %7 : vector<16x128xf32>
    %9 = vector.extract_strided_slice %4 {offsets = [0, 1], sizes = [16, 1], strides = [1, 1]} : vector<16x2xf32> to vector<16x1xf32>
    %10 = vector.broadcast %9 : vector<16x1xf32> to vector<16x128xf32>
    %11 = vector.broadcast %3 : vector<1x128xf32> to vector<16x128xf32>
    %12 = arith.mulf %10, %11 : vector<16x128xf32>
    %13 = arith.addf %8, %12 : vector<16x128xf32>
    %c0_6 = arith.constant 0 : index
    %c0_7 = arith.constant 0 : index
    %c0_8 = arith.constant 0 : index
    %14 = vector.load %arg4[%c0_6, %c0_7, %c0_8] : memref<1x16x128xf32, #tpu.memory_space<vmem>>, vector<1x16x128xf32>
    %15 = vector.shape_cast %14 : vector<1x16x128xf32> to vector<16x128xf32>
    %16 = vector.shape_cast %13 : vector<16x128xf32> to vector<1x16x128xf32>
    tpu.vector_store %arg4[%c0_6, %c0_7, %c0_8], %16 {strides = array<i32>} : memref<1x16x128xf32, #tpu.memory_space<vmem>>, vector<1x16x128xf32>,
    return
  }
  func.func @transform_0(%arg0: i32, %arg1: i32) -> (i32, i32, i32) {
    %c0_i32 = arith.constant 0 : i32
    %c0_i32_0 = arith.constant 0 : i32
    return %arg0, %c0_i32, %arg1 : i32, i32, i32
  }
  func.func @transform_1(%arg0: i32, %arg1: i32) -> (i32, i32) {
    %c0_i32 = arith.constant 0 : i32
    %c0_i32_0 = arith.constant 0 : i32
    %c0_i32_1 = arith.constant 0 : i32
    return %c0_i32, %c0_i32_0 : i32, i32
  }
  func.func @transform_2(%arg0: i32, %arg1: i32) -> (i32, i32, i32) {
    %c0_i32 = arith.constant 0 : i32
    %c0_i32_0 = arith.constant 0 : i32
    return %arg0, %c0_i32, %arg1 : i32, i32, i32
  }
}

</mosaic_0001>

<llo_original>
// kernel: tpu_custom_call.1
$region0: #{tpu_custom_call.1}
  #allocation0 [shape = 'u32[]', space=smem, size = 0x4, offset = 0x4, fixed_abs, tag = 'smem constant byte address 0x4 - core index']
  #allocation1 [shape = 'u32[72,128]{1,0:T(1,128)}', space=vmem, size = 0x9000, scoped, tag = 'internal scratch']
  %s0 = inlined_call_operand.vmem [shape: f32[2,2,128], index: 0, kind: input, shape index: {}]
  %s1 = inlined_call_operand.vmem [shape: f32[16,2], index: 1, kind: input, shape index: {}]
  %s2 = inlined_call_operand.hbm [shape: f32[2,16,128], index: 2, kind: output, shape index: {}]
  %s3 = sld [smem:[#allocation0]]
  $region41: #{tpu_custom_call.1} parent=0
    _
  %s5 = ssub.s32 1, %s3
  %s6 = scalar_select 0, %s5, %s3
  $region1: #{tpu_custom_call.1} parent=0
    #allocation2 [shape = 'u8[16384]{0}', space=vmem, size = 0x4000, scoped, tag = 'output window, operand 0']
    #allocation3 [shape = 's32[2]{0}', space=sflag, size = 0x8, scoped, tag = 'scoped memory for tpu_custom_call.1']
    %7 = vsyncpa [#allocation3], 0
    %s8 = scalar_lea.sflag [#allocation3], 1
    %9 = vsyncpa %s8, 0
    loop: start=0, step=1, limit=4
    $region2: #{tpu_custom_call.1} parent=1 // loop_pre_header
      _
    $region3: #{tpu_custom_call.1} parent=1 // loop_header
      %s11 = sphi 0, %s15
      %p12 = scmp.ge.s32.totalorder %s11, 4
      %s18 = sphi 0, %s30
      %s19 = sphi 0, %s26
      %s20 = sphi 0, %s18
      %s21 = sphi 0, %s19
      %s22 = sphi 0, %s20
      %s23 = sphi 0, %s21
      %s35 = sphi 0, %s37
      %s38 = sphi 0, %s35
      %s39 = sphi 0, %s38
      %s55 = sphi 0, %s39
      %s59 = sphi 0, %s59
      %s61 = sphi 0, %s59
      %s62 = sphi 0, %s61
      %s76 = sphi 0, %s62
      %s84 = sphi 0, %s86
      %s87 = sphi 0, %s84
      %s88 = sphi 0, %s87
      %s104 = sphi 0, %s88
    $region4: #{tpu_custom_call.1} parent=1 // loop_header_branch
      %14 = sbr.rel (%p12) target = $region8
    $region5: #{tpu_custom_call.1} parent=1 // loop_body
      %s16 = ssub.s32 %s11, 1
      %s17 = ssub.s32 %s11, 2
      %s24 = sadd.s32 1, %s19
      %p25 = scmp.ge.s32.totalorder %s24, 1
      %s26 = scalar_select %p25, 0, %s24
      %s27 = sadd.s32 1, %s18
      %s28 = scalar_select %p25, %s27, %s18
      %p29 = scmp.ge.s32.totalorder %s28, 2
      %s30 = scalar_select %p29, 0, %s28
      %s31 = ssub.s32 %s18, %s30
      %s32 = ssub.s32 %s19, %s26
      %s33 = sor.u32 %s31, %s32
      %p34 = scmp.eq.s32.totalorder %s33, 0
      %s36 = sadd.s32 %s35, 1
      %s37 = scalar_select %p34, %s35, %s36
      %p40 = pneg %p34
      %p41 = scmp.eq.s32.totalorder %s11, 1
      %p42 = por %p40, %p41
      %p43 = scmp.ne.s32.totalorder %s35, %s38
      %p44 = scmp.eq.s32.totalorder %s11, 0
      %p45 = por %p43, %p44
      %p46 = scmp.ne.s32.totalorder %s35, %s38
      %p47 = scmp.eq.s32.totalorder %s16, 1
      %p48 = por %p46, %p47
      %p49 = scmp.ne.s32.totalorder %s38, %s39
      %p50 = scmp.eq.s32.totalorder %s16, 0
      %p51 = por %p49, %p50
      %p52 = scmp.ne.s32.totalorder %s38, %s39
      %p53 = scmp.eq.s32.totalorder %s17, 1
      %p54 = por %p52, %p53
      %p56 = scmp.ne.s32.totalorder %s39, %s55
      %p57 = scmp.eq.s32.totalorder %s17, 0
      %p58 = por %p56, %p57
      %s60 = sadd.s32 %s59, 1
      %p63 = scmp.eq.s32.totalorder %s11, 1
      %p64 = scmp.ne.s32.totalorder %s59, %s61
      %p65 = scmp.eq.s32.totalorder %s11, 0
      %p66 = por %p64, %p65
      %p67 = scmp.ne.s32.totalorder %s59, %s61
      %p68 = scmp.eq.s32.totalorder %s16, 1
      %p69 = por %p67, %p68
      %p70 = scmp.ne.s32.totalorder %s61, %s62
      %p71 = scmp.eq.s32.totalorder %s16, 0
      %p72 = por %p70, %p71
      %p73 = scmp.ne.s32.totalorder %s61, %s62
      %p74 = scmp.eq.s32.totalorder %s17, 1
      %p75 = por %p73, %p74
      %p77 = scmp.ne.s32.totalorder %s62, %s76
      %p78 = scmp.eq.s32.totalorder %s17, 0
      %p79 = por %p77, %p78
      %s80 = ssub.s32 %s18, %s30
      %s81 = ssub.s32 %s19, %s26
      %s82 = sor.u32 %s80, %s81
      %p83 = scmp.eq.s32.totalorder %s82, 0
      %s85 = sadd.s32 %s84, 1
      %s86 = scalar_select %p83, %s84, %s85
      %p89 = pneg %p83
      %p90 = scmp.eq.s32.totalorder %s11, 1
      %p91 = por %p89, %p90
      %p92 = scmp.ne.s32.totalorder %s84, %s87
      %p93 = scmp.eq.s32.totalorder %s11, 0
      %p94 = por %p92, %p93
      %p95 = scmp.ne.s32.totalorder %s84, %s87
      %p96 = scmp.eq.s32.totalorder %s16, 1
      %p97 = por %p95, %p96
      %p98 = scmp.ne.s32.totalorder %s87, %s88
      %p99 = scmp.eq.s32.totalorder %s16, 0
      %p100 = por %p98, %p99
      %p101 = scmp.ne.s32.totalorder %s87, %s88
      %p102 = scmp.eq.s32.totalorder %s17, 1
      %p103 = por %p101, %p102
      %p105 = scmp.ne.s32.totalorder %s88, %s104
      %p106 = scmp.eq.s32.totalorder %s17, 0
      %p107 = por %p105, %p106
      %p108 = scmp.le.s32.totalorder 1, %s11
      %p109 = scmp.lt.s32.totalorder %s11, 3
      %p110 = pnand %p108, %p109
      %p111 = pneg %p110
      // Predicated region
      $region9: #{tpu_custom_call.1} parent=5 // pred_check
        _
      $region10: #{tpu_custom_call.1} parent=5 // pred_check_branch
        %113 = sbr.rel (%p110) target = $region12
      $region11: #{tpu_custom_call.1} parent=5 // pred_region
        %s114 = ssub.s32 %s11, 1
        // Predicated region
        $region13: #{tpu_custom_call.1} parent=11 // pred_check
          %p115 = pneg %p72
        $region14: #{tpu_custom_call.1} parent=11 // pred_check_branch
          %117 = sbr.rel (%p115) target = $region16
        $region15: #{tpu_custom_call.1} parent=11 // pred_region
          _
        $region16: #{tpu_custom_call.1} parent=11 // pred_fallthru
          _
      $region12: #{tpu_custom_call.1} parent=5 // pred_fallthru
        _
      %p118 = scmp.lt.s32.totalorder %s11, 2
      // Predicated region
      $region17: #{tpu_custom_call.1} parent=5 // pred_check
        %p119 = pneg %p118
      $region18: #{tpu_custom_call.1} parent=5 // pred_check_branch
        %121 = sbr.rel (%p119) target = $region20
      $region19: #{tpu_custom_call.1} parent=5 // pred_region
        // Predicated region
        $region21: #{tpu_custom_call.1} parent=19 // pred_check
          %p122 = pneg %p45
        $region22: #{tpu_custom_call.1} parent=19 // pred_check_branch
          %124 = sbr.rel (%p122) target = $region24
        $region23: #{tpu_custom_call.1} parent=19 // pred_region
          %p125 = scmp.lt.s32.totalorder %s18, 1
          %s126 = scalar_select %p125, %s18, 1
          %p127 = scmp.lt.s32.totalorder %s19, 0
          %s128 = scalar_select %p127, %s19, 0
          %s129 = sadd.s32 %s128, %s126
          %s130 = smul.addr %s129, 2
          %s131 = scalar_lea.vmem %s0, %s130
        $region24: #{tpu_custom_call.1} parent=19 // pred_fallthru
          _
      $region20: #{tpu_custom_call.1} parent=5 // pred_fallthru
        _
      %p132 = scmp.le.s32.totalorder 1, %s11
      %p133 = scmp.lt.s32.totalorder %s11, 3
      %p134 = pnand %p132, %p133
      %p135 = pneg %p134
      // Predicated region
      $region25: #{tpu_custom_call.1} parent=5 // pred_check
        _
      $region26: #{tpu_custom_call.1} parent=5 // pred_check_branch
        %137 = sbr.rel (%p134) target = $region28
      $region27: #{tpu_custom_call.1} parent=5 // pred_region
        %s138 = ssub.s32 %s11, 1
        %p139 = scmp.lt.s32.totalorder %s20, 1
        %s140 = scalar_select %p139, %s20, 1
        %p141 = scmp.lt.s32.totalorder %s21, 0
        %s142 = scalar_select %p141, %s21, 0
        %s143 = sadd.s32 %s142, %s140
        %s144 = smul.addr %s143, 2
        %s145 = scalar_lea.vmem %s0, %s144
        %p146 = pneg %p51
        %p147 = pneg %p48
        %p148 = pneg %p72
        %p149 = pneg %p69
        %p150 = pneg %p100
        %p151 = pneg %p97
        %s152 = sand.u32 %s87, 1
        %s153 = scalar_lea.sflag [#allocation3], %s152
        %s154 = sand.u32 %s87, 1
        %s155 = smul.addr %s154, 16
        %s156 = scalar_lea.vmem [#allocation2], %s155
        %p157 = scmp.lt.s32.totalorder %s20, 1
        %s158 = scalar_select %p157, %s20, 1
        %p159 = scmp.lt.s32.totalorder %s21, 0
        %s160 = scalar_select %p159, %s21, 0
        %s161 = sadd.s32 %s160, %s158
        %s162 = smul.addr %s161, 2
        %s163 = scalar_lea.vmem %s0, %s162
        %v164 = vld [vmem:[%s163] sm:$0x1]
        %v165 = vld [vmem:[%s163 + $0x1] sm:$0x1]
        %v166 = vld [vmem:[%s1] sm:$0xff]
        %v167 = vld [vmem:[%s1 + $0x8] sm:$0xff]
        %169 = vset.pattern.permute.xlu0 0
        %170 = vperm.xlu0 %169, %v166
        %v171 = vpop.permute.xlu0 %170
        %174 = vset.pattern.permute.xlu0 0
        %175 = vperm.xlu0 %174, %v167
        %v176 = vpop.permute.xlu0 %175
        %v178 = vperm.slane %v164, 0
        %v179 = vmul.f32 %v171, %v178
        %v180 = vmul.f32 %v176, %v178
        %181 = vset.pattern.permute.xlu0 1
        %182 = vperm.xlu0 %181, %v166
        %v183 = vpop.permute.xlu0 %182
        %185 = vset.pattern.permute.xlu0 1
        %186 = vperm.xlu0 %185, %v167
        %v187 = vpop.permute.xlu0 %186
        %v189 = vperm.slane %v165, 0
        %v190 = vmul.f32 %v183, %v189
        %v191 = vmul.f32 %v187, %v189
        %v192 = vadd.f32 %v179, %v190
        %v193 = vadd.f32 %v180, %v191
        %194 = vst [vmem:[%s156] sm:$0xff] %v192
        %195 = vst [vmem:[%s156 + $0x8] sm:$0xff] %v193
        %s196 = sand.u32 %s87, 1
        %s197 = scalar_lea.sflag [#allocation3], %s196
        %s198 = sand.u32 %s87, 1
        %s199 = smul.addr %s198, 16
        %s200 = scalar_lea.vmem [#allocation2], %s199
        // Predicated region
        $region29: #{tpu_custom_call.1} parent=27 // pred_check
          %p201 = pneg %p97
        $region30: #{tpu_custom_call.1} parent=27 // pred_check_branch
          %203 = sbr.rel (%p201) target = $region32
        $region31: #{tpu_custom_call.1} parent=27 // pred_region
          %205 = vsyncadd %s197, 0
          %s206 = smul.addr %s20, 2
          %s207 = sadd.s32 %s21, %s206
          %s208 = smul.addr %s207, 8
          %s209 = scalar_lea.hbm %s2, %s208
          %s210 = sshll.u32 %s200, 4
          %s211 = int_to_ptr.vmem [resolvable:$true] %s210
          %s212 = sshll.u32 %s209, 4
          %s213 = int_to_ptr.hbm [resolvable:$true] %s212
          %218 = dma.vmem_to_hbm [thread:$0]  %s211, 256, %s213, %s197, 128, 128, 8
        $region32: #{tpu_custom_call.1} parent=27 // pred_fallthru
          _
      $region28: #{tpu_custom_call.1} parent=5 // pred_fallthru
        _
      %p219 = scmp.le.s32.totalorder 2, %s11
      // Predicated region
      $region33: #{tpu_custom_call.1} parent=5 // pred_check
        %p220 = pneg %p219
      $region34: #{tpu_custom_call.1} parent=5 // pred_check_branch
        %222 = sbr.rel (%p220) target = $region36
      $region35: #{tpu_custom_call.1} parent=5 // pred_region
        %s223 = ssub.s32 %s11, 2
        // Predicated region
        $region37: #{tpu_custom_call.1} parent=35 // pred_check
          %p224 = pneg %p103
        $region38: #{tpu_custom_call.1} parent=35 // pred_check_branch
          %226 = sbr.rel (%p224) target = $region40
        $region39: #{tpu_custom_call.1} parent=35 // pred_region
          %s227 = sand.u32 %s88, 1
          %s228 = scalar_lea.sflag [#allocation3], %s227
          %s229 = sand.u32 %s88, 1
          %s230 = smul.addr %s229, 16
          %s231 = scalar_lea.vmem [#allocation2], %s230
          %233 = dma.done %s228, 256
        $region40: #{tpu_custom_call.1} parent=35 // pred_fallthru
          _
      $region36: #{tpu_custom_call.1} parent=5 // pred_fallthru
        _
    $region6: #{tpu_custom_call.1} parent=1 // loop_footer
      %s15 = sadd.s32 1, %s11
    $region7: #{tpu_custom_call.1} parent=1 // loop_footer_branch
      %10 = sbr.rel target = $region3
    $region8: #{tpu_custom_call.1} parent=1 // loop_exit
      _
    %234 = vsyncpa [#allocation3], 1
    %s235 = scalar_lea.sflag [#allocation3], 1
    %236 = vsyncpa %s235, 1

</llo_original>
